<compile_context>
chip_gen: v6e
topology: v6e:2x2x1
jax: 0.10.0
libtpu: 0.0.40
codegen_flags: <defaults>
</compile_context>

<pallas_src>
import jax
import jax.numpy as jnp
from jax import lax
from jax.experimental import pallas as pl
from jax.experimental.pallas import tpu as pltpu

LANE = 128      # vreg lane width (batch-tile granularity in the transposed layout)
SUBLANE = 8     # f32 vreg sublane width
HIDDEN = 16     # MLPNet5 hidden width


def _round_up(n, m):
    return (n + m - 1) // m * m


def _mlp5_kernel(x_ref, w1t_ref, wmid_ref, w5t_ref, b_ref, out_ref):
    """Fused 5-layer MLP on one batch tile, computed in transposed layout.

    x_ref   : (tile_m, n_in)      f32   batch tile (natural layout)
    w1t_ref : (16, n_in)          bf16  W1^T
    wmid_ref: (3, 16, 16)         bf16  W2^T, W3^T, W4^T
    w5t_ref : (w5_rows, 16)       bf16  W5^T, rows zero-padded to a multiple of 16
    b_ref   : (b_rows, 8)         f32   column i holds layer-i bias (zero-padded)
    out_ref : (n_out_pad, tile_m) f32   transposed logits tile (classes on sublanes)
    """
    nt_dims = (((1,), (1,)), ((), ()))   # contract lane dims of both operands (A @ B^T)

    xb = x_ref[...].astype(jnp.bfloat16)                       # (tile_m, n_in)
    # Layer 1: (16, n_in) x (tile_m, n_in)^T -> (16, tile_m).  The A @ B^T form
    # performs the logical transpose of x, so x^T is never materialized in HBM.
    h = lax.dot_general(w1t_ref[...], xb, nt_dims,
                        preferred_element_type=jnp.float32)
    h = jnp.maximum(h + b_ref[:HIDDEN, 0:1], 0.0)

    for j in range(3):                                          # layers 2..4
        h = jnp.dot(wmid_ref[j], h.astype(jnp.bfloat16),
                    preferred_element_type=jnp.float32)         # (16, tile_m)
        h = jnp.maximum(h + b_ref[:HIDDEN, j + 1:j + 2], 0.0)

    # Layer 5 (no ReLU).
    out = jnp.dot(w5t_ref[...], h.astype(jnp.bfloat16),
                  preferred_element_type=jnp.float32)           # (w5_rows, tile_m)
    n_out_pad = out_ref.shape[0]
    out_ref[...] = out[:n_out_pad, :] + b_ref[:n_out_pad, 4:5]


def pack_params(params, n_input, n_classes):
    """Pre-transpose weights and pack biases for the transposed-layout kernel."""
    (w1, b1), (w2, b2), (w3, b3), (w4, b4), (w5, b5) = params
    assert w1.shape == (n_input, HIDDEN) and w5.shape == (HIDDEN, n_classes)
    f32 = jnp.float32
    n_out_pad = _round_up(n_classes, SUBLANE)        # f32 output sublane rows
    w5_rows = _round_up(n_classes, 2 * SUBLANE)      # bf16 sublane tile is 16

    w1t = jnp.asarray(w1, f32).T.astype(jnp.bfloat16)                     # (16, n_in)
    wmid = jnp.stack([jnp.asarray(w, f32).T for w in (w2, w3, w4)]
                     ).astype(jnp.bfloat16)                               # (3, 16, 16)
    w5t = (jnp.zeros((w5_rows, HIDDEN), f32)
           .at[:n_classes, :].set(jnp.asarray(w5, f32).T)
           .astype(jnp.bfloat16))                                         # (w5_rows, 16)

    b_rows = max(HIDDEN, n_out_pad)
    b_slab = jnp.zeros((b_rows, SUBLANE), f32)       # column i = bias of layer i
    for i, b in enumerate((b1, b2, b3, b4, b5)):
        bv = jnp.asarray(b, f32).reshape(-1)
        b_slab = b_slab.at[:bv.shape[0], i].set(bv)

    return w1t, wmid, w5t, b_slab, n_out_pad


def _choose_tiling(batch, *, tile_m_max=2048, max_pad_ratio=1.1):
    """Pick (tile_m, b_pad).  tile_m is a multiple of 128 (output lane dim), as
    large as possible (amortizes per-step overhead) while keeping >= 2-4 grid
    steps on bigger batches (v7x megacore) and batch padding <= ~10%."""
    tile_m_max = max(LANE, _round_up(tile_m_max, LANE))
    b_ceil = _round_up(max(batch, 1), LANE)
    n_min = max(1, pl.cdiv(b_ceil, tile_m_max))
    if b_ceil >= 4 * 512:            # big batch: keep both v7x TensorCores busy
        n_min = max(n_min, 4)
    elif b_ceil >= 2 * LANE:
        n_min = max(n_min, 2)
    n_max = pl.cdiv(b_ceil, LANE)
    best = None
    for n_steps in range(n_min, min(n_max, n_min + 16) + 1):
        tile = _round_up(pl.cdiv(b_ceil, n_steps), LANE)
        if tile > tile_m_max:
            continue
        b_pad = n_steps * tile
        if best is None or b_pad < best[0]:
            best = (b_pad, tile)
        if b_pad <= max_pad_ratio * b_ceil:   # largest tile with acceptable padding
            break
    b_pad, tile_m = best
    return tile_m, b_pad


def mlp5_forward(x, params, *, tile_m_max=2048):
    """x: (B, n_input) f32.  params: [(W (in,out), b (out,)) x 5].  Returns (B, n_classes)."""
    B, n_input = x.shape
    n_classes = params[-1][0].shape[1]

    w1t, wmid, w5t, b_slab, n_out_pad = pack_params(params, n_input, n_classes)
    b_rows = b_slab.shape[0]
    w5_rows = w5t.shape[0]

    tile_m, b_pad = _choose_tiling(B, tile_m_max=tile_m_max)
    x = jnp.asarray(x, jnp.float32)
    # Skip the wrapper-side pad copy entirely when B is already tile-aligned.
    x_p = x if b_pad == B else jnp.pad(x, ((0, b_pad - B), (0, 0)))

    out_t = pl.pallas_call(
        _mlp5_kernel,
        out_shape=jax.ShapeDtypeStruct((n_out_pad, b_pad), jnp.float32),
        grid=(b_pad // tile_m,),
        in_specs=[
            pl.BlockSpec((tile_m, n_input), lambda i: (i, 0)),        # batch-tiled x
            pl.BlockSpec((HIDDEN, n_input), lambda i: (0, 0)),        # resident W1^T
            pl.BlockSpec((3, HIDDEN, HIDDEN), lambda i: (0, 0, 0)),   # resident W2-4^T
            pl.BlockSpec((w5_rows, HIDDEN), lambda i: (0, 0)),        # resident W5^T
            pl.BlockSpec((b_rows, SUBLANE), lambda i: (0, 0)),        # resident biases
        ],
        out_specs=pl.BlockSpec((n_out_pad, tile_m), lambda i: (0, i)),  # lane-dense store
        compiler_params=pltpu.CompilerParams(
            dimension_semantics=("parallel",)),                       # v7x: 2 TCs
    )(x_p, w1t, wmid, w5t, b_slab)

    return out_t[:n_classes, :B].T   # tiny wrapper slice/transpose -> (B, n_classes)


def init_params(key, n_input, n_classes):
    """Deterministic init matching the layer shapes of MLPNet5 (PyTorch Linear init)."""
    dims = [(n_input, HIDDEN), (HIDDEN, HIDDEN), (HIDDEN, HIDDEN),
            (HIDDEN, HIDDEN), (HIDDEN, n_classes)]
    params = []
    for i, (fan_in, fan_out) in enumerate(dims):
        kw, kb = jax.random.split(jax.random.fold_in(key, i))
        bound = 1.0 / jnp.sqrt(jnp.float32(fan_in))
        w = jax.random.uniform(kw, (fan_in, fan_out), jnp.float32, -bound, bound)
        b = jax.random.uniform(kb, (fan_out,), jnp.float32, -bound, bound)
        params.append((w, b))
    return params


def _reference_forward(x, params):
    """Pure-JAX reference with the same bf16-operand / f32-accumulate precision."""
    h = jnp.asarray(x, jnp.float32)
    n = len(params)
    for i, (w, b) in enumerate(params):
        h = jnp.dot(h.astype(jnp.bfloat16),
                    jnp.asarray(w, jnp.float32).astype(jnp.bfloat16),
                    preferred_element_type=jnp.float32) + jnp.asarray(b, jnp.float32).reshape(1, -1)
        if i < n - 1:
            h = jnp.maximum(h, 0.0)
    return h


if __name__ == "__main__":
    key = jax.random.PRNGKey(0)
    n_input, n_classes = 32, 4
    kx, kp, kx2 = jax.random.split(key, 3)
    params = init_params(kp, n_input, n_classes)

    # Small batch (exercises row padding, single grid step).
    B = 8
    x = jax.random.normal(kx, (B, n_input), jnp.float32)
    out = jax.block_until_ready(mlp5_forward(x, params))
    ref = _reference_forward(x, params)
    assert out.shape == (B, n_classes)
    assert jnp.allclose(out, ref, atol=2e-3, rtol=2e-3), "mismatch (B=8)"

    # Aligned batch (exercises the no-pad path and a multi-step grid).
    B2 = 384
    x2 = jax.random.normal(kx2, (B2, n_input), jnp.float32)
    out2 = jax.block_until_ready(mlp5_forward(x2, params))
    ref2 = _reference_forward(x2, params)
    assert out2.shape == (B2, n_classes)
    assert jnp.allclose(out2, ref2, atol=2e-3, rtol=2e-3), "mismatch (B=384)"

    print("KERNEL_OK")
</pallas_src>

<mosaic_0001>
module attributes {stable_mosaic.version = 11 : i64} {
  func.func @_mlp5_kernel(%arg0: i32, %arg1: memref<128x32xf32, #tpu.memory_space<vmem>>, %arg2: memref<16x32xbf16, #tpu.memory_space<vmem>>, %arg3: memref<3x16x16xbf16, #tpu.memory_space<vmem>>, %arg4: memref<16x16xbf16, #tpu.memory_space<vmem>>, %arg5: memref<16x8xf32, #tpu.memory_space<vmem>>, %arg6: memref<8x128xf32, #tpu.memory_space<vmem>>) attributes {dimension_semantics = [#tpu.dimension_semantics<parallel>], iteration_bounds = array<i64: 1>, scalar_prefetch = 0 : i64, scratch_operands = 0 : i64, tpu.core_type = #tpu.core_type<tc>, window_params = [{transform_indices = @transform_0, window_bounds = array<i64: 128, 32>}, {pipeline_mode = #tpu.pipeline_mode<synchronous>, transform_indices = @transform_1, window_bounds = array<i64: 16, 32>}, {pipeline_mode = #tpu.pipeline_mode<synchronous>, transform_indices = @transform_2, window_bounds = array<i64: 3, 16, 16>}, {pipeline_mode = #tpu.pipeline_mode<synchronous>, transform_indices = @transform_3, window_bounds = array<i64: 16, 16>}, {pipeline_mode = #tpu.pipeline_mode<synchronous>, transform_indices = @transform_4, window_bounds = array<i64: 16, 8>}, {transform_indices = @transform_5, window_bounds = array<i64: 8, 128>}]} {
    %c0 = arith.constant 0 : index
    %c0_0 = arith.constant 0 : index
    %0 = vector.load %arg1[%c0, %c0_0] : memref<128x32xf32, #tpu.memory_space<vmem>>, vector<128x32xf32>
    %1 = arith.truncf %0 : vector<128x32xf32> to vector<128x32xbf16>
    %c0_1 = arith.constant 0 : index
    %c0_2 = arith.constant 0 : index
    %2 = vector.load %arg2[%c0_1, %c0_2] : memref<16x32xbf16, #tpu.memory_space<vmem>>, vector<16x32xbf16>
    %cst = arith.constant dense<0.000000e+00> : vector<16x128xf32>
    %3 = tpu.matmul %2, %1, %cst {dimension_numbers = #tpu.dot_dimension_numbers<[1], [1], [0], [0], [0, 0, 1, 0], [], []>} : vector<16x32xbf16>, vector<128x32xbf16>, vector<16x128xf32> -> vector<16x128xf32>
    %c0_3 = arith.constant 0 : index
    %c0_4 = arith.constant 0 : index
    %4 = vector.load %arg5[%c0_3, %c0_4] : memref<16x8xf32, #tpu.memory_space<vmem>>, vector<16x1xf32>
    %5 = vector.broadcast %4 : vector<16x1xf32> to vector<16x128xf32>
    %6 = arith.addf %3, %5 : vector<16x128xf32>
    %cst_5 = arith.constant 0.000000e+00 : f32
    %7 = vector.broadcast %cst_5 : f32 to vector<16x128xf32>
    %8 = arith.maximumf %6, %7 : vector<16x128xf32>
    %c0_6 = arith.constant 0 : index
    %c0_7 = arith.constant 0 : index
    %c0_8 = arith.constant 0 : index
    %9 = vector.load %arg3[%c0_6, %c0_7, %c0_8] : memref<3x16x16xbf16, #tpu.memory_space<vmem>>, vector<1x16x16xbf16>
    %10 = vector.shape_cast %9 : vector<1x16x16xbf16> to vector<16x16xbf16>
    %11 = arith.truncf %8 : vector<16x128xf32> to vector<16x128xbf16>
    %cst_9 = arith.constant dense<0.000000e+00> : vector<16x128xf32>
    %12 = tpu.matmul %10, %11, %cst_9 {dimension_numbers = #tpu.dot_dimension_numbers<[1], [0], [0], [1], [0, 0, 1, 1], [], []>} : vector<16x16xbf16>, vector<16x128xbf16>, vector<16x128xf32> -> vector<16x128xf32>
    %c0_10 = arith.constant 0 : index
    %c1 = arith.constant 1 : index
    %13 = vector.load %arg5[%c0_10, %c1] : memref<16x8xf32, #tpu.memory_space<vmem>>, vector<16x1xf32>
    %14 = vector.broadcast %13 : vector<16x1xf32> to vector<16x128xf32>
    %15 = arith.addf %12, %14 : vector<16x128xf32>
    %cst_11 = arith.constant 0.000000e+00 : f32
    %16 = vector.broadcast %cst_11 : f32 to vector<16x128xf32>
    %17 = arith.maximumf %15, %16 : vector<16x128xf32>
    %c1_12 = arith.constant 1 : index
    %c0_13 = arith.constant 0 : index
    %c0_14 = arith.constant 0 : index
    %18 = vector.load %arg3[%c1_12, %c0_13, %c0_14] : memref<3x16x16xbf16, #tpu.memory_space<vmem>>, vector<1x16x16xbf16>
    %19 = vector.shape_cast %18 : vector<1x16x16xbf16> to vector<16x16xbf16>
    %20 = arith.truncf %17 : vector<16x128xf32> to vector<16x128xbf16>
    %cst_15 = arith.constant dense<0.000000e+00> : vector<16x128xf32>
    %21 = tpu.matmul %19, %20, %cst_15 {dimension_numbers = #tpu.dot_dimension_numbers<[1], [0], [0], [1], [0, 0, 1, 1], [], []>} : vector<16x16xbf16>, vector<16x128xbf16>, vector<16x128xf32> -> vector<16x128xf32>
    %c0_16 = arith.constant 0 : index
    %c2 = arith.constant 2 : index
    %22 = vector.load %arg5[%c0_16, %c2] : memref<16x8xf32, #tpu.memory_space<vmem>>, vector<16x1xf32>
    %23 = vector.broadcast %22 : vector<16x1xf32> to vector<16x128xf32>
    %24 = arith.addf %21, %23 : vector<16x128xf32>
    %cst_17 = arith.constant 0.000000e+00 : f32
    %25 = vector.broadcast %cst_17 : f32 to vector<16x128xf32>
    %26 = arith.maximumf %24, %25 : vector<16x128xf32>
    %c2_18 = arith.constant 2 : index
    %c0_19 = arith.constant 0 : index
    %c0_20 = arith.constant 0 : index
    %27 = vector.load %arg3[%c2_18, %c0_19, %c0_20] : memref<3x16x16xbf16, #tpu.memory_space<vmem>>, vector<1x16x16xbf16>
    %28 = vector.shape_cast %27 : vector<1x16x16xbf16> to vector<16x16xbf16>
    %29 = arith.truncf %26 : vector<16x128xf32> to vector<16x128xbf16>
    %cst_21 = arith.constant dense<0.000000e+00> : vector<16x128xf32>
    %30 = tpu.matmul %28, %29, %cst_21 {dimension_numbers = #tpu.dot_dimension_numbers<[1], [0], [0], [1], [0, 0, 1, 1], [], []>} : vector<16x16xbf16>, vector<16x128xbf16>, vector<16x128xf32> -> vector<16x128xf32>
    %c0_22 = arith.constant 0 : index
    %c3 = arith.constant 3 : index
    %31 = vector.load %arg5[%c0_22, %c3] : memref<16x8xf32, #tpu.memory_space<vmem>>, vector<16x1xf32>
    %32 = vector.broadcast %31 : vector<16x1xf32> to vector<16x128xf32>
    %33 = arith.addf %30, %32 : vector<16x128xf32>
    %cst_23 = arith.constant 0.000000e+00 : f32
    %34 = vector.broadcast %cst_23 : f32 to vector<16x128xf32>
    %35 = arith.maximumf %33, %34 : vector<16x128xf32>
    %c0_24 = arith.constant 0 : index
    %c0_25 = arith.constant 0 : index
    %36 = vector.load %arg4[%c0_24, %c0_25] : memref<16x16xbf16, #tpu.memory_space<vmem>>, vector<16x16xbf16>
    %37 = arith.truncf %35 : vector<16x128xf32> to vector<16x128xbf16>
    %cst_26 = arith.constant dense<0.000000e+00> : vector<16x128xf32>
    %38 = tpu.matmul %36, %37, %cst_26 {dimension_numbers = #tpu.dot_dimension_numbers<[1], [0], [0], [1], [0, 0, 1, 1], [], []>} : vector<16x16xbf16>, vector<16x128xbf16>, vector<16x128xf32> -> vector<16x128xf32>
    %39 = vector.extract_strided_slice %38 {offsets = [0, 0], sizes = [8, 128], strides = [1, 1]} : vector<16x128xf32> to vector<8x128xf32>
    %c0_27 = arith.constant 0 : index
    %c4 = arith.constant 4 : index
    %40 = vector.load %arg5[%c0_27, %c4] : memref<16x8xf32, #tpu.memory_space<vmem>>, vector<8x1xf32>
    %41 = vector.broadcast %40 : vector<8x1xf32> to vector<8x128xf32>
    %42 = arith.addf %39, %41 : vector<8x128xf32>
    %c0_28 = arith.constant 0 : index
    %c0_29 = arith.constant 0 : index
    %43 = vector.load %arg6[%c0_28, %c0_29] : memref<8x128xf32, #tpu.memory_space<vmem>>, vector<8x128xf32>
    tpu.vector_store %arg6[%c0_28, %c0_29], %42 {strides = array<i32>} : memref<8x128xf32, #tpu.memory_space<vmem>>, vector<8x128xf32>,
    return
  }
  func.func @transform_0(%arg0: i32) -> (i32, i32) {
    %c0_i32 = arith.constant 0 : i32
    %c0_i32_0 = arith.constant 0 : i32
    return %arg0, %c0_i32 : i32, i32
  }
  func.func @transform_1(%arg0: i32) -> (i32, i32) {
    %c0_i32 = arith.constant 0 : i32
    %c0_i32_0 = arith.constant 0 : i32
    %c0_i32_1 = arith.constant 0 : i32
    return %c0_i32, %c0_i32_0 : i32, i32
  }
  func.func @transform_2(%arg0: i32) -> (i32, i32, i32) {
    %c0_i32 = arith.constant 0 : i32
    %c0_i32_0 = arith.constant 0 : i32
    %c0_i32_1 = arith.constant 0 : i32
    %c0_i32_2 = arith.constant 0 : i32
    return %c0_i32, %c0_i32_0, %c0_i32_1 : i32, i32, i32
  }
  func.func @transform_3(%arg0: i32) -> (i32, i32) {
    %c0_i32 = arith.constant 0 : i32
    %c0_i32_0 = arith.constant 0 : i32
    %c0_i32_1 = arith.constant 0 : i32
    return %c0_i32, %c0_i32_0 : i32, i32
  }
  func.func @transform_4(%arg0: i32) -> (i32, i32) {
    %c0_i32 = arith.constant 0 : i32
    %c0_i32_0 = arith.constant 0 : i32
    %c0_i32_1 = arith.constant 0 : i32
    return %c0_i32, %c0_i32_0 : i32, i32
  }
  func.func @transform_5(%arg0: i32) -> (i32, i32) {
    %c0_i32 = arith.constant 0 : i32
    %c0_i32_0 = arith.constant 0 : i32
    return %c0_i32, %arg0 : i32, i32
  }
}

</mosaic_0001>

<llo_original>
// kernel: tpu_custom_call.1
$region0: #{tpu_custom_call.1}
  #allocation0 [shape = 'u32[]', space=smem, size = 0x4, offset = 0x4, fixed_abs, tag = 'smem constant byte address 0x4 - core index']
  #allocation1 [shape = 'u32[144,128]{1,0:T(1,128)}', space=vmem, size = 0x12000, scoped, tag = 'internal scratch']
  %s0 = inlined_call_operand.vmem [shape: f32[128,32], index: 0, kind: input, shape index: {}]
  %s1 = inlined_call_operand.vmem [shape: bf16[16,32], index: 1, kind: input, shape index: {}]
  %s2 = inlined_call_operand.vmem [shape: bf16[3,16,16], index: 2, kind: input, shape index: {}]
  %s3 = inlined_call_operand.vmem [shape: bf16[16,16], index: 3, kind: input, shape index: {}]
  %s4 = inlined_call_operand.vmem [shape: f32[16,8], index: 4, kind: input, shape index: {}]
  %s5 = inlined_call_operand.hbm [shape: f32[8,128], index: 5, kind: output, shape index: {}]
  %s6 = sld [smem:[#allocation0]]
  $region30: #{tpu_custom_call.1} parent=0
    _
  %s8 = ssub.s32 1, %s6
  %s9 = scalar_select 0, %s8, %s6
  $region1: #{tpu_custom_call.1} parent=0
    #allocation2 [shape = 'u8[4096]{0}', space=vmem, size = 0x1000, scoped, tag = 'output window, operand 0, single buffered']
    #allocation3 [shape = 's32[1]{0}', space=sflag, size = 0x4, scoped, tag = 'scoped memory for tpu_custom_call.1']
    %10 = vsyncpa [#allocation3], 0
    // Predicated region
    $region2: #{tpu_custom_call.1} parent=1 // pred_check
      _
    $region3: #{tpu_custom_call.1} parent=1 // pred_check_branch
      %12 = sbr.rel (0) target = $region5
    $region4: #{tpu_custom_call.1} parent=1 // pred_region
      _
    $region5: #{tpu_custom_call.1} parent=1 // pred_fallthru
      _
    // Predicated region
    $region6: #{tpu_custom_call.1} parent=1 // pred_check
      _
    $region7: #{tpu_custom_call.1} parent=1 // pred_check_branch
      %14 = sbr.rel (0) target = $region9
    $region8: #{tpu_custom_call.1} parent=1 // pred_region
      _
    $region9: #{tpu_custom_call.1} parent=1 // pred_fallthru
      _
    // Predicated region
    $region10: #{tpu_custom_call.1} parent=1 // pred_check
      _
    $region11: #{tpu_custom_call.1} parent=1 // pred_check_branch
      %16 = sbr.rel (0) target = $region13
    $region12: #{tpu_custom_call.1} parent=1 // pred_region
      _
    $region13: #{tpu_custom_call.1} parent=1 // pred_fallthru
      _
    // Predicated region
    $region14: #{tpu_custom_call.1} parent=1 // pred_check
      _
    $region15: #{tpu_custom_call.1} parent=1 // pred_check_branch
      %18 = sbr.rel (0) target = $region17
    $region16: #{tpu_custom_call.1} parent=1 // pred_region
      _
    $region17: #{tpu_custom_call.1} parent=1 // pred_fallthru
      _
    // Predicated region
    $region18: #{tpu_custom_call.1} parent=1 // pred_check
      _
    $region19: #{tpu_custom_call.1} parent=1 // pred_check_branch
      %20 = sbr.rel (0) target = $region21
    $region20: #{tpu_custom_call.1} parent=1 // pred_region
      _
    $region21: #{tpu_custom_call.1} parent=1 // pred_fallthru
      _
    %v22 = vld [vmem:[%s0] sm:$0xff]
    %v23 = vld [vmem:[%s0 + $0x8] sm:$0xff]
    %v24 = vld [vmem:[%s0 + $0x10] sm:$0xff]
    %v25 = vld [vmem:[%s0 + $0x18] sm:$0xff]
    %v26 = vld [vmem:[%s0 + $0x20] sm:$0xff]
    %v27 = vld [vmem:[%s0 + $0x28] sm:$0xff]
    %v28 = vld [vmem:[%s0 + $0x30] sm:$0xff]
    %v29 = vld [vmem:[%s0 + $0x38] sm:$0xff]
    %v30 = vld [vmem:[%s0 + $0x40] sm:$0xff]
    %v31 = vld [vmem:[%s0 + $0x48] sm:$0xff]
    %v32 = vld [vmem:[%s0 + $0x50] sm:$0xff]
    %v33 = vld [vmem:[%s0 + $0x58] sm:$0xff]
    %v34 = vld [vmem:[%s0 + $0x60] sm:$0xff]
    %v35 = vld [vmem:[%s0 + $0x68] sm:$0xff]
    %v36 = vld [vmem:[%s0 + $0x70] sm:$0xff]
    %v37 = vld [vmem:[%s0 + $0x78] sm:$0xff]
    %v38 = vpack.c.bf16 %v23, %v22
    %v39 = vpack.c.bf16 %v25, %v24
    %v40 = vpack.c.bf16 %v27, %v26
    %v41 = vpack.c.bf16 %v29, %v28
    %v42 = vpack.c.bf16 %v31, %v30
    %v43 = vpack.c.bf16 %v33, %v32
    %v44 = vpack.c.bf16 %v35, %v34
    %v45 = vpack.c.bf16 %v37, %v36
    %v46 = vld [vmem:[%s1] sm:$0xf]
    %v47 = vld [vmem:[%s1 + $0x4] sm:$0xf]
    %v48 = vld [vmem:[%s4] sm:$0xff]
    %v49 = vld [vmem:[%s4 + $0x8] sm:$0xff]
    %51 = vset.pattern.permute.xlu0 0
    %52 = vperm.xlu0 %51, %v48
    %v53 = vpop.permute.xlu0 %52
    %56 = vset.pattern.permute.xlu0 0
    %57 = vperm.xlu0 %56, %v49
    %v58 = vpop.permute.xlu0 %57
    %v62 = vunpack.c.l.b16 %v46
    %v63 = vunpack.c.l.b16 %v47
    %v64 = vpack.c.b16 %v63, %v62
    %vm65 = vcmask 261120
    %v67 = vsel %vm65, %v64, 0
    %v70 = vsel %vm65, %v38, 0
    %v73 = vsel %vm65, %v39, 0
    %v76 = vsel %vm65, %v40, 0
    %v79 = vsel %vm65, %v41, 0
    %v82 = vsel %vm65, %v42, 0
    %v85 = vsel %vm65, %v43, 0
    %v88 = vsel %vm65, %v44, 0
    %v91 = vsel %vm65, %v45, 0
    %93 = vmatprep.subr.bf16.mxu0 0
    %94 = vmatpush1.bf16.xpose.msra.mxu0 %v91
    %95 = vmatprep.subr.bf16.mxu0 0
    %96 = vmatpush1.bf16.xpose.msra.mxu0 %v88
    %97 = vmatprep.subr.bf16.mxu0 0
    %98 = vmatpush1.bf16.xpose.msra.mxu0 %v85
    %99 = vmatprep.subr.bf16.mxu0 0
    %100 = vmatpush1.bf16.xpose.msra.mxu0 %v82
    %101 = vmatprep.subr.bf16.mxu0 0
    %102 = vmatpush1.bf16.xpose.msra.mxu0 %v79
    %103 = vmatprep.subr.bf16.mxu0 0
    %104 = vmatpush1.bf16.xpose.msra.mxu0 %v76
    %105 = vmatprep.subr.bf16.mxu0 0
    %106 = vmatpush1.bf16.xpose.msra.mxu0 %v73
    %107 = vmatprep.subr.bf16.mxu0 0
    %108 = vmatpush1.bf16.xpose.msra.mxu0 %v70
    %109 = vmatprep.subr.bf16.mxu0 0
    %110 = vmatpush2.bf16.xpose.msra.mxu0 0
    %111 = vmatprep.subr.bf16.mxu0 0
    %112 = vmatpush2.bf16.xpose.msra.mxu0 0
    %113 = vmatprep.subr.bf16.mxu0 0
    %114 = vmatpush2.bf16.xpose.msra.mxu0 0
    %115 = vmatprep.subr.bf16.mxu0 0
    %116 = vmatpush2.bf16.xpose.msra.mxu0 0
    %117 = vmatprep.subr.bf16.mxu0 0
    %118 = vmatpush2.bf16.xpose.msra.mxu0 0
    %119 = vmatprep.subr.bf16.mxu0 0
    %120 = vmatpush2.bf16.xpose.msra.mxu0 0
    %121 = vmatprep.subr.bf16.mxu0 0
    %122 = vmatpush2.bf16.xpose.msra.mxu0 0
    %123 = vmatprep.subr.bf16.mxu0 0
    %124 = vmatpush2.bf16.xpose.msra.mxu0 0
    %125 = vmatprep.mubr.bf16.mxu0 0
    %126 = vmatmul.mubr.bf16.gmra.mxu0 %v67
    %v127 = vpop.f32.mrf.mxu0
    %v128 = vadd.f32 %v53, %v127
    %v129 = vpop.f32.mrf.mxu0
    %v130 = vpop.f32.mrf.mxu0
    %v131 = vadd.f32 %v58, %v130
    %v132 = vpop.f32.mrf.mxu0
    %133 = vdwg.mxu0
    %v134 = vmax.f32 %v128, 0.0
    %v135 = vmax.f32 %v131, 0.0
    %v136 = vld [vmem:[%s2] sm:$0xf]
    %v137 = vld [vmem:[%s2 + $0x4] sm:$0xf]
    %v138 = vpack.c.bf16 %v135, %v134
    %139 = vset.pattern.permute.xlu0 1
    %140 = vperm.xlu0 %139, %v48
    %v141 = vpop.permute.xlu0 %140
    %143 = vset.pattern.permute.xlu0 1
    %144 = vperm.xlu0 %143, %v49
    %v145 = vpop.permute.xlu0 %144
    %v149 = vunpack.c.l.b16 %v136
    %v150 = vunpack.c.l.b16 %v137
    %v151 = vpack.c.b16 %v150, %v149
    %vm152 = vcmask 130048
    %v154 = vsel %vm152, %v151, 0
    %156 = vmatprep.subr.bf16.mxu0 0
    %157 = vmatpush1.bf16.msra.mxu0 0
    %158 = vmatprep.subr.bf16.mxu0 0
    %159 = vmatpush1.bf16.msra.mxu0 0
    %160 = vmatprep.subr.bf16.mxu0 0
    %161 = vmatpush1.bf16.msra.mxu0 0
    %162 = vmatprep.subr.bf16.mxu0 0
    %163 = vmatpush1.bf16.msra.mxu0 0
    %164 = vmatprep.subr.bf16.mxu0 0
    %165 = vmatpush1.bf16.msra.mxu0 0
    %166 = vmatprep.subr.bf16.mxu0 0
    %167 = vmatpush1.bf16.msra.mxu0 0
    %168 = vmatprep.subr.bf16.mxu0 0
    %169 = vmatpush1.bf16.msra.mxu0 0
    %170 = vmatprep.subr.bf16.mxu0 0
    %171 = vmatpush1.bf16.msra.mxu0 %v138
    %172 = vmatprep.subr.bf16.mxu0 0
    %173 = vmatpush2.bf16.msra.mxu0 0
    %174 = vmatprep.subr.bf16.mxu0 0
    %175 = vmatpush2.bf16.msra.mxu0 0
    %176 = vmatprep.subr.bf16.mxu0 0
    %177 = vmatpush2.bf16.msra.mxu0 0
    %178 = vmatprep.subr.bf16.mxu0 0
    %179 = vmatpush2.bf16.msra.mxu0 0
    %180 = vmatprep.subr.bf16.mxu0 0
    %181 = vmatpush2.bf16.msra.mxu0 0
    %182 = vmatprep.subr.bf16.mxu0 0
    %183 = vmatpush2.bf16.msra.mxu0 0
    %184 = vmatprep.subr.bf16.mxu0 0
    %185 = vmatpush2.bf16.msra.mxu0 0
    %186 = vmatprep.subr.bf16.mxu0 0
    %187 = vmatpush2.bf16.msra.mxu0 0
    %188 = vmatprep.mubr.bf16.mxu0 0
    %189 = vmatmul.mubr.bf16.gmra.mxu0 %v154
    %v190 = vpop.f32.mrf.mxu0
    %v191 = vadd.f32 %v141, %v190
    %v192 = vpop.f32.mrf.mxu0
    %v193 = vpop.f32.mrf.mxu0
    %v194 = vadd.f32 %v145, %v193
    %v195 = vpop.f32.mrf.mxu0
    %196 = vdwg.mxu0
    %v197 = vmax.f32 %v191, 0.0
    %v198 = vmax.f32 %v194, 0.0
    %s199 = scalar_lea.vmem %s2, 8
    %v200 = vld [vmem:[%s199] sm:$0xf]
    %v201 = vld [vmem:[%s199 + $0x4] sm:$0xf]
    %v202 = vpack.c.bf16 %v198, %v197
    %203 = vset.pattern.permute.xlu0 2
    %204 = vperm.xlu0 %203, %v48
    %v205 = vpop.permute.xlu0 %204
    %207 = vset.pattern.permute.xlu0 2
    %208 = vperm.xlu0 %207, %v49
    %v209 = vpop.permute.xlu0 %208
    %v213 = vunpack.c.l.b16 %v200
    %v214 = vunpack.c.l.b16 %v201
    %v215 = vpack.c.b16 %v214, %v213
    %v217 = vsel %vm152, %v215, 0
    %219 = vmatprep.subr.bf16.mxu0 0
    %220 = vmatpush1.bf16.msra.mxu0 0
    %221 = vmatprep.subr.bf16.mxu0 0
    %222 = vmatpush1.bf16.msra.mxu0 0
    %223 = vmatprep.subr.bf16.mxu0 0
    %224 = vmatpush1.bf16.msra.mxu0 0
    %225 = vmatprep.subr.bf16.mxu0 0
    %226 = vmatpush1.bf16.msra.mxu0 0
    %227 = vmatprep.subr.bf16.mxu0 0
    %228 = vmatpush1.bf16.msra.mxu0 0
    %229 = vmatprep.subr.bf16.mxu0 0
    %230 = vmatpush1.bf16.msra.mxu0 0
    %231 = vmatprep.subr.bf16.mxu0 0
    %232 = vmatpush1.bf16.msra.mxu0 0
    %233 = vmatprep.subr.bf16.mxu0 0
    %234 = vmatpush1.bf16.msra.mxu0 %v202
    %235 = vmatprep.subr.bf16.mxu0 0
    %236 = vmatpush2.bf16.msra.mxu0 0
    %237 = vmatprep.subr.bf16.mxu0 0
    %238 = vmatpush2.bf16.msra.mxu0 0
    %239 = vmatprep.subr.bf16.mxu0 0
    %240 = vmatpush2.bf16.msra.mxu0 0
    %241 = vmatprep.subr.bf16.mxu0 0
    %242 = vmatpush2.bf16.msra.mxu0 0
    %243 = vmatprep.subr.bf16.mxu0 0
    %244 = vmatpush2.bf16.msra.mxu0 0
    %245 = vmatprep.subr.bf16.mxu0 0
    %246 = vmatpush2.bf16.msra.mxu0 0
    %247 = vmatprep.subr.bf16.mxu0 0
    %248 = vmatpush2.bf16.msra.mxu0 0
    %249 = vmatprep.subr.bf16.mxu0 0
    %250 = vmatpush2.bf16.msra.mxu0 0
    %251 = vmatprep.mubr.bf16.mxu0 0
    %252 = vmatmul.mubr.bf16.gmra.mxu0 %v217
    %v253 = vpop.f32.mrf.mxu0
    %v254 = vadd.f32 %v205, %v253
    %v255 = vpop.f32.mrf.mxu0
    %v256 = vpop.f32.mrf.mxu0
    %v257 = vadd.f32 %v209, %v256
    %v258 = vpop.f32.mrf.mxu0
    %259 = vdwg.mxu0
    %v260 = vmax.f32 %v254, 0.0
    %v261 = vmax.f32 %v257, 0.0
    %s262 = scalar_lea.vmem %s2, 16
    %v263 = vld [vmem:[%s262] sm:$0xf]
    %v264 = vld [vmem:[%s262 + $0x4] sm:$0xf]
    %v265 = vpack.c.bf16 %v261, %v260
    %266 = vset.pattern.permute.xlu0 3
    %267 = vperm.xlu0 %266, %v48
    %v268 = vpop.permute.xlu0 %267
    %270 = vset.pattern.permute.xlu0 3
    %271 = vperm.xlu0 %270, %v49
    %v272 = vpop.permute.xlu0 %271
    %v276 = vunpack.c.l.b16 %v263
    %v277 = vunpack.c.l.b16 %v264
    %v278 = vpack.c.b16 %v277, %v276
    %v280 = vsel %vm152, %v278, 0
    %282 = vmatprep.subr.bf16.mxu0 0
    %283 = vmatpush1.bf16.msra.mxu0 0
    %284 = vmatprep.subr.bf16.mxu0 0
    %285 = vmatpush1.bf16.msra.mxu0 0
    %286 = vmatprep.subr.bf16.mxu0 0
    %287 = vmatpush1.bf16.msra.mxu0 0
    %288 = vmatprep.subr.bf16.mxu0 0
    %289 = vmatpush1.bf16.msra.mxu0 0
    %290 = vmatprep.subr.bf16.mxu0 0
    %291 = vmatpush1.bf16.msra.mxu0 0
    %292 = vmatprep.subr.bf16.mxu0 0
    %293 = vmatpush1.bf16.msra.mxu0 0
    %294 = vmatprep.subr.bf16.mxu0 0
    %295 = vmatpush1.bf16.msra.mxu0 0
    %296 = vmatprep.subr.bf16.mxu0 0
    %297 = vmatpush1.bf16.msra.mxu0 %v265
    %298 = vmatprep.subr.bf16.mxu0 0
    %299 = vmatpush2.bf16.msra.mxu0 0
    %300 = vmatprep.subr.bf16.mxu0 0
    %301 = vmatpush2.bf16.msra.mxu0 0
    %302 = vmatprep.subr.bf16.mxu0 0
    %303 = vmatpush2.bf16.msra.mxu0 0
    %304 = vmatprep.subr.bf16.mxu0 0
    %305 = vmatpush2.bf16.msra.mxu0 0
    %306 = vmatprep.subr.bf16.mxu0 0
    %307 = vmatpush2.bf16.msra.mxu0 0
    %308 = vmatprep.subr.bf16.mxu0 0
    %309 = vmatpush2.bf16.msra.mxu0 0
    %310 = vmatprep.subr.bf16.mxu0 0
    %311 = vmatpush2.bf16.msra.mxu0 0
    %312 = vmatprep.subr.bf16.mxu0 0
    %313 = vmatpush2.bf16.msra.mxu0 0
    %314 = vmatprep.mubr.bf16.mxu0 0
    %315 = vmatmul.mubr.bf16.gmra.mxu0 %v280
    %v316 = vpop.f32.mrf.mxu0
    %v317 = vadd.f32 %v268, %v316
    %v318 = vpop.f32.mrf.mxu0
    %v319 = vpop.f32.mrf.mxu0
    %v320 = vadd.f32 %v272, %v319
    %v321 = vpop.f32.mrf.mxu0
    %322 = vdwg.mxu0
    %v323 = vmax.f32 %v317, 0.0
    %v324 = vmax.f32 %v320, 0.0
    %v325 = vld [vmem:[%s3] sm:$0xf]
    %v326 = vld [vmem:[%s3 + $0x4] sm:$0xf]
    %v327 = vpack.c.bf16 %v324, %v323
    %v330 = vunpack.c.l.b16 %v325
    %v331 = vunpack.c.l.b16 %v326
    %v332 = vpack.c.b16 %v331, %v330
    %v334 = vsel %vm152, %v332, 0
    %336 = vmatprep.subr.bf16.mxu0 0
    %337 = vmatpush1.bf16.msra.mxu0 0
    %338 = vmatprep.subr.bf16.mxu0 0
    %339 = vmatpush1.bf16.msra.mxu0 0
    %340 = vmatprep.subr.bf16.mxu0 0
    %341 = vmatpush1.bf16.msra.mxu0 0
    %342 = vmatprep.subr.bf16.mxu0 0
    %343 = vmatpush1.bf16.msra.mxu0 0
    %344 = vmatprep.subr.bf16.mxu0 0
    %345 = vmatpush1.bf16.msra.mxu0 0
    %346 = vmatprep.subr.bf16.mxu0 0
    %347 = vmatpush1.bf16.msra.mxu0 0
    %348 = vmatprep.subr.bf16.mxu0 0
    %349 = vmatpush1.bf16.msra.mxu0 0
    %350 = vmatprep.subr.bf16.mxu0 0
    %351 = vmatpush1.bf16.msra.mxu0 %v327
    %352 = vmatprep.subr.bf16.mxu0 0
    %353 = vmatpush2.bf16.msra.mxu0 0
    %354 = vmatprep.subr.bf16.mxu0 0
    %355 = vmatpush2.bf16.msra.mxu0 0
    %356 = vmatprep.subr.bf16.mxu0 0
    %357 = vmatpush2.bf16.msra.mxu0 0
    %358 = vmatprep.subr.bf16.mxu0 0
    %359 = vmatpush2.bf16.msra.mxu0 0
    %360 = vmatprep.subr.bf16.mxu0 0
    %361 = vmatpush2.bf16.msra.mxu0 0
    %362 = vmatprep.subr.bf16.mxu0 0
    %363 = vmatpush2.bf16.msra.mxu0 0
    %364 = vmatprep.subr.bf16.mxu0 0
    %365 = vmatpush2.bf16.msra.mxu0 0
    %366 = vmatprep.subr.bf16.mxu0 0
    %367 = vmatpush2.bf16.msra.mxu0 0
    %368 = vmatprep.mubr.bf16.mxu0 0
    %369 = vmatmul.mubr.bf16.gmra.mxu0 %v334
    %v370 = vpop.f32.mrf.mxu0
    %v371 = vadd.f32 0.0, %v370
    %v372 = vpop.f32.mrf.mxu0
    %v373 = vpop.f32.mrf.mxu0
    %v374 = vpop.f32.mrf.mxu0
    %375 = vdwg.mxu0
    %v376 = vld [vmem:[%s4] sm:$0xff]
    %378 = vset.pattern.permute.xlu0 4
    %379 = vperm.xlu0 %378, %v376
    %v380 = vpop.permute.xlu0 %379
    %v382 = vadd.f32 %v371, %v380
    %383 = vst [vmem:[#allocation2] sm:$0xff] %v382
    // Predicated region
    $region22: #{tpu_custom_call.1} parent=1 // pred_check
      _
    $region23: #{tpu_custom_call.1} parent=1 // pred_check_branch
      %385 = sbr.rel (0) target = $region25
    $region24: #{tpu_custom_call.1} parent=1 // pred_region
      %s387 = ssub.s32 128, 128
      %388 = vsyncadd [#allocation3], %s387
      %s390 = sshll.u32 [#allocation2], 4
      %s391 = int_to_ptr.vmem [resolvable:$true] %s390
      %393 = dma.vmem_to_hbm [thread:$0]  %s391, 128, %s5, [#allocation3]
    $region25: #{tpu_custom_call.1} parent=1 // pred_fallthru
      _
    // Predicated region
    $region26: #{tpu_custom_call.1} parent=1 // pred_check
      _
    $region27: #{tpu_custom_call.1} parent=1 // pred_check_branch
      %395 = sbr.rel (0) target = $region29
    $region28: #{tpu_custom_call.1} parent=1 // pred_region
      %396 = dma.done [#allocation3], 128
    $region29: #{tpu_custom_call.1} parent=1 // pred_fallthru
      _
    %397 = vsyncpa [#allocation3], 1

</llo_original>
